<compile_context>
chip_gen: v5e
topology: v5e:2x2
jax: 0.10.0
libtpu: 0.0.40
codegen_flags: <defaults>
</compile_context>

<pallas_src>
import functools

import jax
import jax.numpy as jnp
from jax.experimental import pallas as pl
from jax.experimental.pallas import tpu as pltpu


def _round_up(n, m):
    return ((n + m - 1) // m) * m


# ---------------------------------------------------------------------------
# Kernel: fused decoder(Linear+ReLU, Linear+Sigmoid) -> classifier(Linear+ReLU,
# Linear) on one batch tile.  Weights/biases are VMEM-resident across the grid.
# ---------------------------------------------------------------------------
def _hybrid_kernel(x_ref,
                   w1_ref, b1_ref,   # decoder layer 1 (Linear + ReLU)
                   w2_ref, b2_ref,   # decoder layer 2 (Linear + Sigmoid)
                   w3_ref, b3_ref,   # classifier layer 1 (Linear + ReLU)
                   w4_ref, b4_ref,   # classifier layer 2 (Linear -> logits)
                   o_ref):
    bf16 = jnp.bfloat16

    # --- decoder ---  (bf16 MXU operands, f32 accumulate, f32 elementwise)
    h = jnp.dot(x_ref[...].astype(bf16), w1_ref[...],
                preferred_element_type=jnp.float32) + b1_ref[...]
    h = jnp.maximum(h, 0.0)                                        # ReLU

    img = jnp.dot(h.astype(bf16), w2_ref[...],
                  preferred_element_type=jnp.float32) + b2_ref[...]
    img = jax.nn.sigmoid(img)                                      # Sigmoid
    # NOTE: padded `img` columns are sigmoid(0) = 0.5, NOT 0.  Exactness of the
    # classifier relies on the matching *rows* of w3 being zero-padded (they
    # are, see prepare_params), so those columns contribute exactly 0.

    # --- classifier ---
    h2 = jnp.dot(img.astype(bf16), w3_ref[...],
                 preferred_element_type=jnp.float32) + b3_ref[...]
    h2 = jnp.maximum(h2, 0.0)                                      # ReLU

    logits = jnp.dot(h2.astype(bf16), w4_ref[...],
                     preferred_element_type=jnp.float32) + b4_ref[...]

    # lane-dense (tm, 128) unmasked store; padded class columns are exact zeros.
    o_ref[...] = logits.astype(o_ref.dtype)


# ---------------------------------------------------------------------------
# One-time parameter preparation (hoisted out of the per-forward path).
# ---------------------------------------------------------------------------
def prepare_params(params):
    """Pad + cast the weights ONCE.

    * Layer output dims (and therefore the downstream contraction dims) are
      zero-padded to multiples of 128: lane-aligned MXU N dims and a
      lane-dense output store.  Zero padding is exact: padded activation
      columns are either 0 (ReLU) or hit zero-padded weight rows downstream.
    * The latent (first contraction) dim is padded only to the bf16 sublane
      tile (16), NOT 128 -- x is the only streamed input per grid step.
    """
    (w1, b1, w2, b2, w3, b3, w4, b4) = params
    lat_p = _round_up(w1.shape[0], 16)
    h1_p = _round_up(w1.shape[1], 128)
    img_p = _round_up(w2.shape[1], 128)
    h2_p = _round_up(w3.shape[1], 128)
    cls_p = _round_up(w4.shape[1], 128)

    def pad2(a, rows, cols, dtype):
        return jnp.pad(a, ((0, rows - a.shape[0]), (0, cols - a.shape[1]))).astype(dtype)

    bf16, f32 = jnp.bfloat16, jnp.float32
    w1p = pad2(w1, lat_p, h1_p, bf16); b1p = pad2(b1, 1, h1_p, f32)
    w2p = pad2(w2, h1_p, img_p, bf16); b2p = pad2(b2, 1, img_p, f32)
    w3p = pad2(w3, img_p, h2_p, bf16); b3p = pad2(b3, 1, h2_p, f32)
    w4p = pad2(w4, h2_p, cls_p, bf16); b4p = pad2(b4, 1, cls_p, f32)
    return (w1p, b1p, w2p, b2p, w3p, b3p, w4p, b4p)


def _pick_tile_m(batch_p, tile_m):
    """Largest multiple of 8 that divides batch_p, is <= tile_m, and (when the
    batch allows it) leaves >= 2 grid steps so the 'parallel' batch axis can
    shard across both TensorCores on v7x."""
    want_steps = 2 if batch_p >= 16 else 1
    best = 8
    for cand in range(8, min(tile_m, batch_p) + 1, 8):
        if batch_p % cand == 0 and batch_p // cand >= want_steps:
            best = cand
    return best


# ---------------------------------------------------------------------------
# Forward pass (jitted): pad x -> fused Pallas kernel -> slice -> flatten.
# ---------------------------------------------------------------------------
@functools.partial(jax.jit, static_argnames=("num_classes", "tile_m"))
def hybrid_model_forward(x, padded_params, *, num_classes, tile_m=256):
    """hybrid_model.forward: decoder -> classifier -> flatten().

    tile_m: sweep per generation (<=128..256 on v7x, 256..512 on v6e/v5e).
    """
    (w1p, b1p, w2p, b2p, w3p, b3p, w4p, b4p) = padded_params
    batch, latent = x.shape
    lat_p = w1p.shape[0]
    h1_p, img_p = w2p.shape
    h2_p, cls_p = w4p.shape

    # Batch padded only to a multiple of 8 (not tile_m); tm divides batch_p.
    batch_p = _round_up(batch, 8)
    tm = _pick_tile_m(batch_p, tile_m)
    grid = (batch_p // tm,)

    # x stays f32 in HBM (cast to bf16 inside the kernel): the (tm, lat_p)
    # block is natively (8,128)-tileable and x's DMA is tiny vs. the weights.
    xp = jnp.pad(x, ((0, batch_p - batch), (0, lat_p - latent)))

    # Weights/biases: full-array blocks with constant index_map -> VMEM-resident
    # while batch tiles are software-pipelined HBM<->VMEM.
    # TODO(synk): at realistic ART layer widths on v7x (64 MiB VMEM), request
    # single-buffering of these constant blocks (pipeline_mode=pl.Buffered(1))
    # to halve their residency; trivial at these toy shapes.
    resident = lambda a: pl.BlockSpec(a.shape, lambda i: (0, 0))

    flops = 2 * batch_p * (lat_p * h1_p + h1_p * img_p + img_p * h2_p + h2_p * cls_p)
    bytes_accessed = (xp.size * 4
                      + sum(w.size * 2 for w in (w1p, w2p, w3p, w4p))
                      + sum(b.size * 4 for b in (b1p, b2p, b3p, b4p))
                      + batch_p * cls_p * 4)
    cost = pl.CostEstimate(flops=flops,
                           transcendentals=batch_p * img_p,   # sigmoid
                           bytes_accessed=bytes_accessed)

    logits = pl.pallas_call(
        _hybrid_kernel,
        out_shape=jax.ShapeDtypeStruct((batch_p, cls_p), jnp.float32),
        grid=grid,
        in_specs=[pl.BlockSpec((tm, lat_p), lambda i: (i, 0)),
                  resident(w1p), resident(b1p),
                  resident(w2p), resident(b2p),
                  resident(w3p), resident(b3p),
                  resident(w4p), resident(b4p)],
        out_specs=pl.BlockSpec((tm, cls_p), lambda i: (i, 0)),
        compiler_params=pltpu.CompilerParams(
            dimension_semantics=("parallel",),      # shard batch tiles across TCs (v7x)
            vmem_limit_bytes=32 * 1024 * 1024),     # tiny footprint; safe on all gens
        cost_estimate=cost,
    )(xp, w1p, b1p, w2p, b2p, w3p, b3p, w4p, b4p)

    # hybrid_model.forward returns x.flatten(); drop padding first (fused by jit).
    return logits[:batch, :num_classes].reshape(-1)


# ---------------------------------------------------------------------------
# Deterministic synthetic weights + pure-JAX reference.
# ---------------------------------------------------------------------------
def init_params(key, latent_dim, dec_hidden, img_dim, cls_hidden, num_classes):
    """Deterministic synthetic weights (shapes implied by the module)."""
    ks = jax.random.split(key, 8)
    scale = 0.05
    w1 = scale * jax.random.normal(ks[0], (latent_dim, dec_hidden), jnp.float32)
    b1 = scale * jax.random.normal(ks[1], (1, dec_hidden), jnp.float32)
    w2 = scale * jax.random.normal(ks[2], (dec_hidden, img_dim), jnp.float32)
    b2 = scale * jax.random.normal(ks[3], (1, img_dim), jnp.float32)
    w3 = scale * jax.random.normal(ks[4], (img_dim, cls_hidden), jnp.float32)
    b3 = scale * jax.random.normal(ks[5], (1, cls_hidden), jnp.float32)
    w4 = scale * jax.random.normal(ks[6], (cls_hidden, num_classes), jnp.float32)
    b4 = scale * jax.random.normal(ks[7], (1, num_classes), jnp.float32)
    return (w1, b1, w2, b2, w3, b3, w4, b4)


def reference_forward(x, params):
    """Pure-JAX reference using the same bf16-operand / f32-accumulate recipe.
    (This is a lower-precision approximation of the f32 PyTorch module; expect
    ~1e-2-level deviations from PyTorch, which is fine for this check.)"""
    (w1, b1, w2, b2, w3, b3, w4, b4) = params
    bf = lambda a: a.astype(jnp.bfloat16)
    h = jnp.maximum(jnp.dot(bf(x), bf(w1), preferred_element_type=jnp.float32) + b1, 0.0)
    img = jax.nn.sigmoid(jnp.dot(bf(h), bf(w2), preferred_element_type=jnp.float32) + b2)
    h2 = jnp.maximum(jnp.dot(bf(img), bf(w3), preferred_element_type=jnp.float32) + b3, 0.0)
    logits = jnp.dot(bf(h2), bf(w4), preferred_element_type=jnp.float32) + b4
    return logits.reshape(-1)


if __name__ == "__main__":
    # Small shapes: latent code of a decoder, flattened 16x16 single-channel image.
    batch = 2
    latent_dim = 16
    dec_hidden = 64
    img_dim = 256          # 1 x 16 x 16 flattened decoder output
    cls_hidden = 64
    num_classes = 8

    key = jax.random.PRNGKey(0)
    kx, kp = jax.random.split(key)
    x = jax.random.normal(kx, (batch, latent_dim), jnp.float32)
    params = init_params(kp, latent_dim, dec_hidden, img_dim, cls_hidden, num_classes)

    # Pad/cast the weights ONCE (hoisted out of the per-call path).
    padded_params = jax.tree_util.tree_map(jax.block_until_ready,
                                           prepare_params(params))

    out = hybrid_model_forward(x, padded_params, num_classes=num_classes)
    out = jax.block_until_ready(out)

    ref = reference_forward(x, params)
    assert out.shape == (batch * num_classes,)
    assert jnp.allclose(out, ref, atol=2e-3, rtol=2e-3), "mismatch vs reference"

    print("KERNEL_OK")
</pallas_src>

<mosaic_0001>
module attributes {stable_mosaic.version = 11 : i64} {
  func.func @_hybrid_kernel(%arg0: i32, %arg1: memref<8x16xf32, #tpu.memory_space<vmem>>, %arg2: memref<16x128xbf16, #tpu.memory_space<vmem>>, %arg3: memref<1x128xf32, #tpu.memory_space<vmem>>, %arg4: memref<128x256xbf16, #tpu.memory_space<vmem>>, %arg5: memref<1x256xf32, #tpu.memory_space<vmem>>, %arg6: memref<256x128xbf16, #tpu.memory_space<vmem>>, %arg7: memref<1x128xf32, #tpu.memory_space<vmem>>, %arg8: memref<128x128xbf16, #tpu.memory_space<vmem>>, %arg9: memref<1x128xf32, #tpu.memory_space<vmem>>, %arg10: memref<8x128xf32, #tpu.memory_space<vmem>>) attributes {dimension_semantics = [#tpu.dimension_semantics<parallel>], iteration_bounds = array<i64: 1>, scalar_prefetch = 0 : i64, scratch_operands = 0 : i64, tpu.core_type = #tpu.core_type<tc>, window_params = [{transform_indices = @transform_0, window_bounds = array<i64: 8, 16>}, {pipeline_mode = #tpu.pipeline_mode<synchronous>, transform_indices = @transform_1, window_bounds = array<i64: 16, 128>}, {pipeline_mode = #tpu.pipeline_mode<synchronous>, transform_indices = @transform_2, window_bounds = array<i64: 1, 128>}, {pipeline_mode = #tpu.pipeline_mode<synchronous>, transform_indices = @transform_3, window_bounds = array<i64: 128, 256>}, {pipeline_mode = #tpu.pipeline_mode<synchronous>, transform_indices = @transform_4, window_bounds = array<i64: 1, 256>}, {pipeline_mode = #tpu.pipeline_mode<synchronous>, transform_indices = @transform_5, window_bounds = array<i64: 256, 128>}, {pipeline_mode = #tpu.pipeline_mode<synchronous>, transform_indices = @transform_6, window_bounds = array<i64: 1, 128>}, {pipeline_mode = #tpu.pipeline_mode<synchronous>, transform_indices = @transform_7, window_bounds = array<i64: 128, 128>}, {pipeline_mode = #tpu.pipeline_mode<synchronous>, transform_indices = @transform_8, window_bounds = array<i64: 1, 128>}, {transform_indices = @transform_9, window_bounds = array<i64: 8, 128>}]} {
    %c0 = arith.constant 0 : index
    %c0_0 = arith.constant 0 : index
    %0 = vector.load %arg1[%c0, %c0_0] : memref<8x16xf32, #tpu.memory_space<vmem>>, vector<8x16xf32>
    %1 = arith.truncf %0 : vector<8x16xf32> to vector<8x16xbf16>
    %c0_1 = arith.constant 0 : index
    %c0_2 = arith.constant 0 : index
    %2 = vector.load %arg2[%c0_1, %c0_2] : memref<16x128xbf16, #tpu.memory_space<vmem>>, vector<16x128xbf16>
    %cst = arith.constant dense<0.000000e+00> : vector<8x128xf32>
    %3 = tpu.matmul %1, %2, %cst {dimension_numbers = #tpu.dot_dimension_numbers<[1], [0], [0], [1], [0, 0, 1, 1], [], []>} : vector<8x16xbf16>, vector<16x128xbf16>, vector<8x128xf32> -> vector<8x128xf32>
    %c0_3 = arith.constant 0 : index
    %c0_4 = arith.constant 0 : index
    %4 = vector.load %arg3[%c0_3, %c0_4] : memref<1x128xf32, #tpu.memory_space<vmem>>, vector<1x128xf32>
    %5 = vector.broadcast %4 : vector<1x128xf32> to vector<8x128xf32>
    %6 = arith.addf %3, %5 : vector<8x128xf32>
    %cst_5 = arith.constant 0.000000e+00 : f32
    %7 = vector.broadcast %cst_5 : f32 to vector<8x128xf32>
    %8 = arith.maximumf %6, %7 : vector<8x128xf32>
    %9 = arith.truncf %8 : vector<8x128xf32> to vector<8x128xbf16>
    %c0_6 = arith.constant 0 : index
    %c0_7 = arith.constant 0 : index
    %10 = vector.load %arg4[%c0_6, %c0_7] : memref<128x256xbf16, #tpu.memory_space<vmem>>, vector<128x256xbf16>
    %cst_8 = arith.constant dense<0.000000e+00> : vector<8x256xf32>
    %11 = tpu.matmul %9, %10, %cst_8 {dimension_numbers = #tpu.dot_dimension_numbers<[1], [0], [0], [1], [0, 0, 1, 1], [], []>} : vector<8x128xbf16>, vector<128x256xbf16>, vector<8x256xf32> -> vector<8x256xf32>
    %c0_9 = arith.constant 0 : index
    %c0_10 = arith.constant 0 : index
    %12 = vector.load %arg5[%c0_9, %c0_10] : memref<1x256xf32, #tpu.memory_space<vmem>>, vector<1x256xf32>
    %13 = vector.broadcast %12 : vector<1x256xf32> to vector<8x256xf32>
    %14 = arith.addf %11, %13 : vector<8x256xf32>
    %15 = arith.negf %14 : vector<8x256xf32>
    %16 = math.exp %15 : vector<8x256xf32>
    %cst_11 = arith.constant 1.000000e+00 : f32
    %17 = vector.broadcast %cst_11 : f32 to vector<8x256xf32>
    %18 = arith.addf %17, %16 : vector<8x256xf32>
    %19 = arith.divf %17, %18 : vector<8x256xf32>
    %20 = arith.truncf %19 : vector<8x256xf32> to vector<8x256xbf16>
    %c0_12 = arith.constant 0 : index
    %c0_13 = arith.constant 0 : index
    %21 = vector.load %arg6[%c0_12, %c0_13] : memref<256x128xbf16, #tpu.memory_space<vmem>>, vector<256x128xbf16>
    %cst_14 = arith.constant dense<0.000000e+00> : vector<8x128xf32>
    %22 = tpu.matmul %20, %21, %cst_14 {dimension_numbers = #tpu.dot_dimension_numbers<[1], [0], [0], [1], [0, 0, 1, 1], [], []>} : vector<8x256xbf16>, vector<256x128xbf16>, vector<8x128xf32> -> vector<8x128xf32>
    %c0_15 = arith.constant 0 : index
    %c0_16 = arith.constant 0 : index
    %23 = vector.load %arg7[%c0_15, %c0_16] : memref<1x128xf32, #tpu.memory_space<vmem>>, vector<1x128xf32>
    %24 = vector.broadcast %23 : vector<1x128xf32> to vector<8x128xf32>
    %25 = arith.addf %22, %24 : vector<8x128xf32>
    %cst_17 = arith.constant 0.000000e+00 : f32
    %26 = vector.broadcast %cst_17 : f32 to vector<8x128xf32>
    %27 = arith.maximumf %25, %26 : vector<8x128xf32>
    %28 = arith.truncf %27 : vector<8x128xf32> to vector<8x128xbf16>
    %c0_18 = arith.constant 0 : index
    %c0_19 = arith.constant 0 : index
    %29 = vector.load %arg8[%c0_18, %c0_19] : memref<128x128xbf16, #tpu.memory_space<vmem>>, vector<128x128xbf16>
    %cst_20 = arith.constant dense<0.000000e+00> : vector<8x128xf32>
    %30 = tpu.matmul %28, %29, %cst_20 {dimension_numbers = #tpu.dot_dimension_numbers<[1], [0], [0], [1], [0, 0, 1, 1], [], []>} : vector<8x128xbf16>, vector<128x128xbf16>, vector<8x128xf32> -> vector<8x128xf32>
    %c0_21 = arith.constant 0 : index
    %c0_22 = arith.constant 0 : index
    %31 = vector.load %arg9[%c0_21, %c0_22] : memref<1x128xf32, #tpu.memory_space<vmem>>, vector<1x128xf32>
    %32 = vector.broadcast %31 : vector<1x128xf32> to vector<8x128xf32>
    %33 = arith.addf %30, %32 : vector<8x128xf32>
    %c0_23 = arith.constant 0 : index
    %c0_24 = arith.constant 0 : index
    %34 = vector.load %arg10[%c0_23, %c0_24] : memref<8x128xf32, #tpu.memory_space<vmem>>, vector<8x128xf32>
    tpu.vector_store %arg10[%c0_23, %c0_24], %33 {strides = array<i32>} : memref<8x128xf32, #tpu.memory_space<vmem>>, vector<8x128xf32>,
    return
  }
  func.func @transform_0(%arg0: i32) -> (i32, i32) {
    %c0_i32 = arith.constant 0 : i32
    %c0_i32_0 = arith.constant 0 : i32
    return %arg0, %c0_i32 : i32, i32
  }
  func.func @transform_1(%arg0: i32) -> (i32, i32) {
    %c0_i32 = arith.constant 0 : i32
    %c0_i32_0 = arith.constant 0 : i32
    %c0_i32_1 = arith.constant 0 : i32
    return %c0_i32, %c0_i32_0 : i32, i32
  }
  func.func @transform_2(%arg0: i32) -> (i32, i32) {
    %c0_i32 = arith.constant 0 : i32
    %c0_i32_0 = arith.constant 0 : i32
    %c0_i32_1 = arith.constant 0 : i32
    return %c0_i32, %c0_i32_0 : i32, i32
  }
  func.func @transform_3(%arg0: i32) -> (i32, i32) {
    %c0_i32 = arith.constant 0 : i32
    %c0_i32_0 = arith.constant 0 : i32
    %c0_i32_1 = arith.constant 0 : i32
    return %c0_i32, %c0_i32_0 : i32, i32
  }
  func.func @transform_4(%arg0: i32) -> (i32, i32) {
    %c0_i32 = arith.constant 0 : i32
    %c0_i32_0 = arith.constant 0 : i32
    %c0_i32_1 = arith.constant 0 : i32
    return %c0_i32, %c0_i32_0 : i32, i32
  }
  func.func @transform_5(%arg0: i32) -> (i32, i32) {
    %c0_i32 = arith.constant 0 : i32
    %c0_i32_0 = arith.constant 0 : i32
    %c0_i32_1 = arith.constant 0 : i32
    return %c0_i32, %c0_i32_0 : i32, i32
  }
  func.func @transform_6(%arg0: i32) -> (i32, i32) {
    %c0_i32 = arith.constant 0 : i32
    %c0_i32_0 = arith.constant 0 : i32
    %c0_i32_1 = arith.constant 0 : i32
    return %c0_i32, %c0_i32_0 : i32, i32
  }
  func.func @transform_7(%arg0: i32) -> (i32, i32) {
    %c0_i32 = arith.constant 0 : i32
    %c0_i32_0 = arith.constant 0 : i32
    %c0_i32_1 = arith.constant 0 : i32
    return %c0_i32, %c0_i32_0 : i32, i32
  }
  func.func @transform_8(%arg0: i32) -> (i32, i32) {
    %c0_i32 = arith.constant 0 : i32
    %c0_i32_0 = arith.constant 0 : i32
    %c0_i32_1 = arith.constant 0 : i32
    return %c0_i32, %c0_i32_0 : i32, i32
  }
  func.func @transform_9(%arg0: i32) -> (i32, i32) {
    %c0_i32 = arith.constant 0 : i32
    %c0_i32_0 = arith.constant 0 : i32
    return %arg0, %c0_i32 : i32, i32
  }
}

</mosaic_0001>

<llo_original>
// kernel: hybrid_model_forward.1
$region0: #{hybrid_model_forward.1}
  #allocation0 [shape = 'u32[]', space=smem, size = 0x4, offset = 0x4, fixed_abs, tag = 'smem constant byte address 0x4 - core index']
  #allocation1 [shape = 'u32[72,128]{1,0:T(1,128)}', space=vmem, size = 0x9000, scoped, tag = 'internal scratch']
  %s0 = inlined_call_operand.vmem [shape: f32[8,16], index: 0, kind: input, shape index: {}]
  %s1 = inlined_call_operand.vmem [shape: bf16[16,128], index: 1, kind: input, shape index: {}]
  %s2 = inlined_call_operand.vmem [shape: f32[1,128], index: 2, kind: input, shape index: {}]
  %s3 = inlined_call_operand.hbm [shape: bf16[128,256], index: 3, kind: input, shape index: {}]
  %s4 = inlined_call_operand.vmem [shape: f32[1,256], index: 4, kind: input, shape index: {}]
  %s5 = inlined_call_operand.hbm [shape: bf16[256,128], index: 5, kind: input, shape index: {}]
  %s6 = inlined_call_operand.vmem [shape: f32[1,128], index: 6, kind: input, shape index: {}]
  %s7 = inlined_call_operand.hbm [shape: bf16[128,128], index: 7, kind: input, shape index: {}]
  %s8 = inlined_call_operand.vmem [shape: f32[1,128], index: 8, kind: input, shape index: {}]
  %s9 = inlined_call_operand.vmem [shape: f32[8,128], index: 9, kind: output, shape index: {}]
  %s10 = sld [smem:[#allocation0]]
  $region58: #{hybrid_model_forward.1} parent=0
    _
  %s12 = ssub.s32 1, %s10
  %s13 = scalar_select 0, %s12, %s10
  $region1: #{hybrid_model_forward.1} parent=0
    #allocation2 [shape = 'u8[65536]{0}', space=vmem, size = 0x10000, scoped, tag = 'input window, operand 3, single buffered']
    #allocation3 [shape = 's32[1]{0}', space=sflag, size = 0x4, scoped, tag = 'scoped memory for hybrid_model_forward.1']
    #allocation4 [shape = 'u8[65536]{0}', space=vmem, size = 0x10000, scoped, tag = 'input window, operand 5, single buffered']
    #allocation5 [shape = 's32[1]{0}', space=sflag, size = 0x4, scoped, tag = 'scoped memory for hybrid_model_forward.1']
    #allocation6 [shape = 'u8[32768]{0}', space=vmem, size = 0x8000, scoped, tag = 'input window, operand 7, single buffered']
    %14 = vsyncpa [#allocation3], 0
    %15 = vsyncpa [#allocation5], 0
    // Predicated region
    $region2: #{hybrid_model_forward.1} parent=1 // pred_check
      _
    $region3: #{hybrid_model_forward.1} parent=1 // pred_check_branch
      %17 = sbr.rel (0) target = $region5
    $region4: #{hybrid_model_forward.1} parent=1 // pred_region
      _
    $region5: #{hybrid_model_forward.1} parent=1 // pred_fallthru
      _
    // Predicated region
    $region6: #{hybrid_model_forward.1} parent=1 // pred_check
      _
    $region7: #{hybrid_model_forward.1} parent=1 // pred_check_branch
      %19 = sbr.rel (0) target = $region9
    $region8: #{hybrid_model_forward.1} parent=1 // pred_region
      _
    $region9: #{hybrid_model_forward.1} parent=1 // pred_fallthru
      _
    // Predicated region
    $region10: #{hybrid_model_forward.1} parent=1 // pred_check
      _
    $region11: #{hybrid_model_forward.1} parent=1 // pred_check_branch
      %21 = sbr.rel (0) target = $region13
    $region12: #{hybrid_model_forward.1} parent=1 // pred_region
      _
    $region13: #{hybrid_model_forward.1} parent=1 // pred_fallthru
      _
    // Predicated region
    $region14: #{hybrid_model_forward.1} parent=1 // pred_check
      _
    $region15: #{hybrid_model_forward.1} parent=1 // pred_check_branch
      %23 = sbr.rel (0) target = $region17
    $region16: #{hybrid_model_forward.1} parent=1 // pred_region
      %25 = vsyncadd [#allocation3], 0
      %s26 = sshll.u32 %s3, 4
      %s27 = int_to_ptr.hbm [resolvable:$true] %s26
      %s28 = sshll.u32 [#allocation2], 4
      %s29 = int_to_ptr.vmem [resolvable:$true] %s28
      %34 = dma.hbm_to_vmem [thread:$0]  %s27, 2048, %s29, [#allocation3], 128, 128, 8
    $region17: #{hybrid_model_forward.1} parent=1 // pred_fallthru
      _
    // Predicated region
    $region18: #{hybrid_model_forward.1} parent=1 // pred_check
      _
    $region19: #{hybrid_model_forward.1} parent=1 // pred_check_branch
      %36 = sbr.rel (0) target = $region21
    $region20: #{hybrid_model_forward.1} parent=1 // pred_region
      _
    $region21: #{hybrid_model_forward.1} parent=1 // pred_fallthru
      _
    // Predicated region
    $region22: #{hybrid_model_forward.1} parent=1 // pred_check
      _
    $region23: #{hybrid_model_forward.1} parent=1 // pred_check_branch
      %38 = sbr.rel (0) target = $region25
    $region24: #{hybrid_model_forward.1} parent=1 // pred_region
      %40 = vsyncadd [#allocation5], 0
      %s41 = sshll.u32 %s5, 4
      %s42 = int_to_ptr.hbm [resolvable:$true] %s41
      %s43 = sshll.u32 [#allocation4], 4
      %s44 = int_to_ptr.vmem [resolvable:$true] %s43
      %49 = dma.hbm_to_vmem [thread:$0]  %s42, 2048, %s44, [#allocation5], 64, 64, 4
    $region25: #{hybrid_model_forward.1} parent=1 // pred_fallthru
      _
    // Predicated region
    $region26: #{hybrid_model_forward.1} parent=1 // pred_check
      _
    $region27: #{hybrid_model_forward.1} parent=1 // pred_check_branch
      %51 = sbr.rel (0) target = $region29
    $region28: #{hybrid_model_forward.1} parent=1 // pred_region
      _
    $region29: #{hybrid_model_forward.1} parent=1 // pred_fallthru
      _
    // Predicated region
    $region30: #{hybrid_model_forward.1} parent=1 // pred_check
      _
    $region31: #{hybrid_model_forward.1} parent=1 // pred_check_branch
      %53 = sbr.rel (0) target = $region33
    $region32: #{hybrid_model_forward.1} parent=1 // pred_region
      %55 = vsyncadd [#allocation5], 0
      %s56 = sshll.u32 %s7, 4
      %s57 = int_to_ptr.hbm [resolvable:$true] %s56
      %s58 = sshll.u32 [#allocation6], 4
      %s59 = int_to_ptr.vmem [resolvable:$true] %s58
      %64 = dma.hbm_to_vmem [thread:$0]  %s57, 1024, %s59, [#allocation5], 64, 64, 4
    $region33: #{hybrid_model_forward.1} parent=1 // pred_fallthru
      _
    // Predicated region
    $region34: #{hybrid_model_forward.1} parent=1 // pred_check
      _
    $region35: #{hybrid_model_forward.1} parent=1 // pred_check_branch
      %66 = sbr.rel (0) target = $region37
    $region36: #{hybrid_model_forward.1} parent=1 // pred_region
      _
    $region37: #{hybrid_model_forward.1} parent=1 // pred_fallthru
      _
    // Predicated region
    $region38: #{hybrid_model_forward.1} parent=1 // pred_check
      _
    $region39: #{hybrid_model_forward.1} parent=1 // pred_check_branch
      %68 = sbr.rel (0) target = $region41
    $region40: #{hybrid_model_forward.1} parent=1 // pred_region
      %70 = dma.done [#allocation3], 2048
    $region41: #{hybrid_model_forward.1} parent=1 // pred_fallthru
      _
    // Predicated region
    $region42: #{hybrid_model_forward.1} parent=1 // pred_check
      _
    $region43: #{hybrid_model_forward.1} parent=1 // pred_check_branch
      %72 = sbr.rel (0) target = $region45
    $region44: #{hybrid_model_forward.1} parent=1 // pred_region
      %74 = dma.done [#allocation5], 2048
    $region45: #{hybrid_model_forward.1} parent=1 // pred_fallthru
      _
    // Predicated region
    $region46: #{hybrid_model_forward.1} parent=1 // pred_check
      _
    $region47: #{hybrid_model_forward.1} parent=1 // pred_check_branch
      %76 = sbr.rel (0) target = $region49
    $region48: #{hybrid_model_forward.1} parent=1 // pred_region
      %78 = dma.done [#allocation5], 1024
    $region49: #{hybrid_model_forward.1} parent=1 // pred_fallthru
      _
    %v80 = vld [vmem:[%s0] sm:$0xff]
    %v81 = vpack.c.bf16 %v80, %v80
    %v82 = vld [vmem:[%s1] sm:$0xf]
    %v83 = vld [vmem:[%s1 + $0x4] sm:$0xf]
    %v84 = vld [vmem:[%s2] sm:$0x1]
    %v86 = vperm.slane %v84, 0
    %v90 = vunpack.c.l.b16 %v82
    %v91 = vunpack.c.l.b16 %v83
    %v92 = vpack.c.b16 %v91, %v90
    %vm94 = vcmask 130048
    %v96 = vsel %vm94, %v81, 0
    %98 = vmatpush.bf16.msra.mxu0 0
    %99 = vmatpush.bf16.msra.mxu0 0
    %100 = vmatpush.bf16.msra.mxu0 0
    %101 = vmatpush.bf16.msra.mxu0 0
    %102 = vmatpush.bf16.msra.mxu0 0
    %103 = vmatpush.bf16.msra.mxu0 0
    %104 = vmatpush.bf16.msra.mxu0 0
    %105 = vmatpush.bf16.msra.mxu0 %v92
    %106 = vmatmul.bf16.gmra.mxu0 %v96
    %v107 = vpop.f32.mrf.mxu0
    %v108 = vadd.f32 %v86, %v107
    %v109 = vpop.f32.mrf.mxu0
    %110 = vdwg.mxu0
    %v111 = vmax.f32 %v108, 0.0
    %v112 = vpack.c.bf16 %v111, %v111
    %v113 = vld [vmem:[#allocation2] sm:$0xff]
    %v114 = vld [vmem:[#allocation2 + $0x8] sm:$0xff]
    %v115 = vld [vmem:[#allocation2 + $0x10] sm:$0xff]
    %v116 = vld [vmem:[#allocation2 + $0x18] sm:$0xff]
    %v117 = vld [vmem:[#allocation2 + $0x20] sm:$0xff]
    %v118 = vld [vmem:[#allocation2 + $0x28] sm:$0xff]
    %v119 = vld [vmem:[#allocation2 + $0x30] sm:$0xff]
    %v120 = vld [vmem:[#allocation2 + $0x38] sm:$0xff]
    %v121 = vld [vmem:[#allocation2 + $0x40] sm:$0xff]
    %v122 = vld [vmem:[#allocation2 + $0x48] sm:$0xff]
    %v123 = vld [vmem:[#allocation2 + $0x50] sm:$0xff]
    %v124 = vld [vmem:[#allocation2 + $0x58] sm:$0xff]
    %v125 = vld [vmem:[#allocation2 + $0x60] sm:$0xff]
    %v126 = vld [vmem:[#allocation2 + $0x68] sm:$0xff]
    %v127 = vld [vmem:[#allocation2 + $0x70] sm:$0xff]
    %v128 = vld [vmem:[#allocation2 + $0x78] sm:$0xff]
    %v129 = vld [vmem:[%s4] sm:$0x3]
    %v131 = vperm.slane %v129, 0
    %v132 = vperm.slane %v129, 1
    %v151 = vunpack.c.l.b16 %v113
    %v152 = vunpack.c.h.b16 %v113
    %v153 = vunpack.c.l.b16 %v114
    %v154 = vunpack.c.h.b16 %v114
    %v155 = vunpack.c.l.b16 %v115
    %v156 = vunpack.c.h.b16 %v115
    %v157 = vunpack.c.l.b16 %v116
    %v158 = vunpack.c.h.b16 %v116
    %v159 = vunpack.c.l.b16 %v117
    %v160 = vunpack.c.h.b16 %v117
    %v161 = vunpack.c.l.b16 %v118
    %v162 = vunpack.c.h.b16 %v118
    %v163 = vunpack.c.l.b16 %v119
    %v164 = vunpack.c.h.b16 %v119
    %v165 = vunpack.c.l.b16 %v120
    %v166 = vunpack.c.h.b16 %v120
    %v167 = vunpack.c.l.b16 %v121
    %v168 = vunpack.c.h.b16 %v121
    %v169 = vunpack.c.l.b16 %v122
    %v170 = vunpack.c.h.b16 %v122
    %v171 = vunpack.c.l.b16 %v123
    %v172 = vunpack.c.h.b16 %v123
    %v173 = vunpack.c.l.b16 %v124
    %v174 = vunpack.c.h.b16 %v124
    %v175 = vunpack.c.l.b16 %v125
    %v176 = vunpack.c.h.b16 %v125
    %v177 = vunpack.c.l.b16 %v126
    %v178 = vunpack.c.h.b16 %v126
    %v179 = vunpack.c.l.b16 %v127
    %v180 = vunpack.c.h.b16 %v127
    %v181 = vunpack.c.l.b16 %v128
    %v182 = vunpack.c.h.b16 %v128
    %v183 = vpack.c.b16 %v153, %v151
    %v184 = vpack.c.b16 %v154, %v152
    %v185 = vpack.c.b16 %v157, %v155
    %v186 = vpack.c.b16 %v158, %v156
    %v187 = vpack.c.b16 %v161, %v159
    %v188 = vpack.c.b16 %v162, %v160
    %v189 = vpack.c.b16 %v165, %v163
    %v190 = vpack.c.b16 %v166, %v164
    %v191 = vpack.c.b16 %v169, %v167
    %v192 = vpack.c.b16 %v170, %v168
    %v193 = vpack.c.b16 %v173, %v171
    %v194 = vpack.c.b16 %v174, %v172
    %v195 = vpack.c.b16 %v177, %v175
    %v196 = vpack.c.b16 %v178, %v176
    %v197 = vpack.c.b16 %v181, %v179
    %v198 = vpack.c.b16 %v182, %v180
    %215 = vmatpush.bf16.msra.mxu0 %v197
    %216 = vmatpush.bf16.msra.mxu0 %v195
    %217 = vmatpush.bf16.msra.mxu0 %v193
    %218 = vmatpush.bf16.msra.mxu0 %v191
    %219 = vmatpush.bf16.msra.mxu0 %v189
    %220 = vmatpush.bf16.msra.mxu0 %v187
    %221 = vmatpush.bf16.msra.mxu0 %v185
    %222 = vmatpush.bf16.msra.mxu0 %v183
    %223 = vmatmul.bf16.gmra.mxu0 %v112
    %v224 = vpop.f32.mrf.mxu0
    %v225 = vadd.f32 %v131, %v224
    %v226 = vpop.f32.mrf.mxu0
    %227 = vdwg.mxu0
    %228 = vmatpush.bf16.msra.mxu0 %v198
    %229 = vmatpush.bf16.msra.mxu0 %v196
    %230 = vmatpush.bf16.msra.mxu0 %v194
    %231 = vmatpush.bf16.msra.mxu0 %v192
    %232 = vmatpush.bf16.msra.mxu0 %v190
    %233 = vmatpush.bf16.msra.mxu0 %v188
    %234 = vmatpush.bf16.msra.mxu0 %v186
    %235 = vmatpush.bf16.msra.mxu0 %v184
    %236 = vmatmul.bf16.gmra.mxu0 %v112
    %v237 = vpop.f32.mrf.mxu0
    %v238 = vadd.f32 %v132, %v237
    %v239 = vpop.f32.mrf.mxu0
    %240 = vdwg.mxu0
    %v241 = vxor.u32 %v225, 2147483648
    %v242 = vxor.u32 %v238, 2147483648
    %v243 = vmul.f32 %v241, 1.442695
    %v244 = vpow.pop %v243
    %v245 = vmul.f32 %v242, 1.442695
    %v246 = vpow.pop %v245
    %v247 = vadd.f32 %v244, 1.0
    %v248 = vadd.f32 %v246, 1.0
    %v249 = vrcp.pop %v247
    %v250 = vmul.f32 %v247, %v249
    %v251 = vsub.f32 1.0, %v250
    %v252 = vmul.f32 %v249, %v251
    %v253 = vadd.f32 %v249, %v252
    %vm254 = vweird.f32 %v247
    %vm255 = vweird.f32 %v249
    %vm256 = vmor %vm254, %vm255
    %v257 = vsel %vm256, %v249, %v253
    %v258 = vand.u32 2147483647, %v247
    %vm259 = vcmp.eq.f32.partialorder %v258, 8.507059e+37
    %v260 = vand.u32 %v247, 2147483648
    %v261 = vor.u32 1.1754944e-38, %v260
    %v262 = vsel %vm259, %v261, %v257
    %v263 = vmul.f32 1.0, %v262
    %v264 = vrcp.pop %v248
    %v265 = vmul.f32 %v248, %v264
    %v266 = vsub.f32 1.0, %v265
    %v267 = vmul.f32 %v264, %v266
    %v268 = vadd.f32 %v264, %v267
    %vm269 = vweird.f32 %v248
    %vm270 = vweird.f32 %v264
    %vm271 = vmor %vm269, %vm270
    %v272 = vsel %vm271, %v264, %v268
    %v273 = vand.u32 2147483647, %v248
    %vm274 = vcmp.eq.f32.partialorder %v273, 8.507059e+37
    %v275 = vand.u32 %v248, 2147483648
    %v276 = vor.u32 1.1754944e-38, %v275
    %v277 = vsel %vm274, %v276, %v272
    %v278 = vmul.f32 1.0, %v277
    %v279 = vpack.c.bf16 %v263, %v263
    %v280 = vpack.c.bf16 %v278, %v278
    %v281 = vld [vmem:[#allocation4] sm:$0xf]
    %v282 = vld [vmem:[#allocation4 + $0x4] sm:$0xf]
    %v283 = vld [vmem:[#allocation4 + $0x8] sm:$0xf]
    %v284 = vld [vmem:[#allocation4 + $0xc] sm:$0xf]
    %v285 = vld [vmem:[#allocation4 + $0x10] sm:$0xf]
    %v286 = vld [vmem:[#allocation4 + $0x14] sm:$0xf]
    %v287 = vld [vmem:[#allocation4 + $0x18] sm:$0xf]
    %v288 = vld [vmem:[#allocation4 + $0x1c] sm:$0xf]
    %v289 = vld [vmem:[#allocation4 + $0x20] sm:$0xf]
    %v290 = vld [vmem:[#allocation4 + $0x24] sm:$0xf]
    %v291 = vld [vmem:[#allocation4 + $0x28] sm:$0xf]
    %v292 = vld [vmem:[#allocation4 + $0x2c] sm:$0xf]
    %v293 = vld [vmem:[#allocation4 + $0x30] sm:$0xf]
    %v294 = vld [vmem:[#allocation4 + $0x34] sm:$0xf]
    %v295 = vld [vmem:[#allocation4 + $0x38] sm:$0xf]
    %v296 = vld [vmem:[#allocation4 + $0x3c] sm:$0xf]
    %v297 = vld [vmem:[#allocation4 + $0x40] sm:$0xf]
    %v298 = vld [vmem:[#allocation4 + $0x44] sm:$0xf]
    %v299 = vld [vmem:[#allocation4 + $0x48] sm:$0xf]
    %v300 = vld [vmem:[#allocation4 + $0x4c] sm:$0xf]
    %v301 = vld [vmem:[#allocation4 + $0x50] sm:$0xf]
    %v302 = vld [vmem:[#allocation4 + $0x54] sm:$0xf]
    %v303 = vld [vmem:[#allocation4 + $0x58] sm:$0xf]
    %v304 = vld [vmem:[#allocation4 + $0x5c] sm:$0xf]
    %v305 = vld [vmem:[#allocation4 + $0x60] sm:$0xf]
    %v306 = vld [vmem:[#allocation4 + $0x64] sm:$0xf]
    %v307 = vld [vmem:[#allocation4 + $0x68] sm:$0xf]
    %v308 = vld [vmem:[#allocation4 + $0x6c] sm:$0xf]
    %v309 = vld [vmem:[#allocation4 + $0x70] sm:$0xf]
    %v310 = vld [vmem:[#allocation4 + $0x74] sm:$0xf]
    %v311 = vld [vmem:[#allocation4 + $0x78] sm:$0xf]
    %v312 = vld [vmem:[#allocation4 + $0x7c] sm:$0xf]
    %v313 = vld [vmem:[%s6] sm:$0x1]
    %v315 = vperm.slane %v313, 0
    %v349 = vunpack.c.l.b16 %v281
    %v350 = vunpack.c.l.b16 %v282
    %v351 = vunpack.c.l.b16 %v283
    %v352 = vunpack.c.l.b16 %v284
    %v353 = vunpack.c.l.b16 %v285
    %v354 = vunpack.c.l.b16 %v286
    %v355 = vunpack.c.l.b16 %v287
    %v356 = vunpack.c.l.b16 %v288
    %v357 = vunpack.c.l.b16 %v289
    %v358 = vunpack.c.l.b16 %v290
    %v359 = vunpack.c.l.b16 %v291
    %v360 = vunpack.c.l.b16 %v292
    %v361 = vunpack.c.l.b16 %v293
    %v362 = vunpack.c.l.b16 %v294
    %v363 = vunpack.c.l.b16 %v295
    %v364 = vunpack.c.l.b16 %v296
    %v365 = vunpack.c.l.b16 %v297
    %v366 = vunpack.c.l.b16 %v298
    %v367 = vunpack.c.l.b16 %v299
    %v368 = vunpack.c.l.b16 %v300
    %v369 = vunpack.c.l.b16 %v301
    %v370 = vunpack.c.l.b16 %v302
    %v371 = vunpack.c.l.b16 %v303
    %v372 = vunpack.c.l.b16 %v304
    %v373 = vunpack.c.l.b16 %v305
    %v374 = vunpack.c.l.b16 %v306
    %v375 = vunpack.c.l.b16 %v307
    %v376 = vunpack.c.l.b16 %v308
    %v377 = vunpack.c.l.b16 %v309
    %v378 = vunpack.c.l.b16 %v310
    %v379 = vunpack.c.l.b16 %v311
    %v380 = vunpack.c.l.b16 %v312
    %v381 = vpack.c.b16 %v350, %v349
    %v382 = vpack.c.b16 %v352, %v351
    %v383 = vpack.c.b16 %v354, %v353
    %v384 = vpack.c.b16 %v356, %v355
    %v385 = vpack.c.b16 %v358, %v357
    %v386 = vpack.c.b16 %v360, %v359
    %v387 = vpack.c.b16 %v362, %v361
    %v388 = vpack.c.b16 %v364, %v363
    %v389 = vpack.c.b16 %v366, %v365
    %v390 = vpack.c.b16 %v368, %v367
    %v391 = vpack.c.b16 %v370, %v369
    %v392 = vpack.c.b16 %v372, %v371
    %v393 = vpack.c.b16 %v374, %v373
    %v394 = vpack.c.b16 %v376, %v375
    %v395 = vpack.c.b16 %v378, %v377
    %v396 = vpack.c.b16 %v380, %v379
    %413 = vmatpush.bf16.msra.mxu0 %v388
    %414 = vmatpush.bf16.msra.mxu0 %v387
    %415 = vmatpush.bf16.msra.mxu0 %v386
    %416 = vmatpush.bf16.msra.mxu0 %v385
    %417 = vmatpush.bf16.msra.mxu0 %v384
    %418 = vmatpush.bf16.msra.mxu0 %v383
    %419 = vmatpush.bf16.msra.mxu0 %v382
    %420 = vmatpush.bf16.msra.mxu0 %v381
    %421 = vmatmul.bf16.gmra.mxu0 %v279
    %v422 = vpop.f32.mrf.mxu0
    %v423 = vadd.f32 %v315, %v422
    %v424 = vpop.f32.mrf.mxu0
    %425 = vdwg.mxu0
    %426 = vmatpush.bf16.msra.mxu0 %v396
    %427 = vmatpush.bf16.msra.mxu0 %v395
    %428 = vmatpush.bf16.msra.mxu0 %v394
    %429 = vmatpush.bf16.msra.mxu0 %v393
    %430 = vmatpush.bf16.msra.mxu0 %v392
    %431 = vmatpush.bf16.msra.mxu0 %v391
    %432 = vmatpush.bf16.msra.mxu0 %v390
    %433 = vmatpush.bf16.msra.mxu0 %v389
    %434 = vmatmul.bf16.gmra.mxu0 %v280
    %v435 = vpop.f32.mrf.mxu0
    %v436 = vadd.f32 %v423, %v435
    %v437 = vpop.f32.mrf.mxu0
    %438 = vdwg.mxu0
    %v439 = vmax.f32 %v436, 0.0
    %v440 = vpack.c.bf16 %v439, %v439
    %v441 = vld [vmem:[#allocation6] sm:$0xf]
    %v442 = vld [vmem:[#allocation6 + $0x4] sm:$0xf]
    %v443 = vld [vmem:[#allocation6 + $0x8] sm:$0xf]
    %v444 = vld [vmem:[#allocation6 + $0xc] sm:$0xf]
    %v445 = vld [vmem:[#allocation6 + $0x10] sm:$0xf]
    %v446 = vld [vmem:[#allocation6 + $0x14] sm:$0xf]
    %v447 = vld [vmem:[#allocation6 + $0x18] sm:$0xf]
    %v448 = vld [vmem:[#allocation6 + $0x1c] sm:$0xf]
    %v449 = vld [vmem:[#allocation6 + $0x20] sm:$0xf]
    %v450 = vld [vmem:[#allocation6 + $0x24] sm:$0xf]
    %v451 = vld [vmem:[#allocation6 + $0x28] sm:$0xf]
    %v452 = vld [vmem:[#allocation6 + $0x2c] sm:$0xf]
    %v453 = vld [vmem:[#allocation6 + $0x30] sm:$0xf]
    %v454 = vld [vmem:[#allocation6 + $0x34] sm:$0xf]
    %v455 = vld [vmem:[#allocation6 + $0x38] sm:$0xf]
    %v456 = vld [vmem:[#allocation6 + $0x3c] sm:$0xf]
    %v457 = vld [vmem:[%s8] sm:$0x1]
    %v459 = vperm.slane %v457, 0
    %v477 = vunpack.c.l.b16 %v441
    %v478 = vunpack.c.l.b16 %v442
    %v479 = vunpack.c.l.b16 %v443
    %v480 = vunpack.c.l.b16 %v444
    %v481 = vunpack.c.l.b16 %v445
    %v482 = vunpack.c.l.b16 %v446
    %v483 = vunpack.c.l.b16 %v447
    %v484 = vunpack.c.l.b16 %v448
    %v485 = vunpack.c.l.b16 %v449
    %v486 = vunpack.c.l.b16 %v450
    %v487 = vunpack.c.l.b16 %v451
    %v488 = vunpack.c.l.b16 %v452
    %v489 = vunpack.c.l.b16 %v453
    %v490 = vunpack.c.l.b16 %v454
    %v491 = vunpack.c.l.b16 %v455
    %v492 = vunpack.c.l.b16 %v456
    %v493 = vpack.c.b16 %v478, %v477
    %v494 = vpack.c.b16 %v480, %v479
    %v495 = vpack.c.b16 %v482, %v481
    %v496 = vpack.c.b16 %v484, %v483
    %v497 = vpack.c.b16 %v486, %v485
    %v498 = vpack.c.b16 %v488, %v487
    %v499 = vpack.c.b16 %v490, %v489
    %v500 = vpack.c.b16 %v492, %v491
    %509 = vmatpush.bf16.msra.mxu0 %v500
    %510 = vmatpush.bf16.msra.mxu0 %v499
    %511 = vmatpush.bf16.msra.mxu0 %v498
    %512 = vmatpush.bf16.msra.mxu0 %v497
    %513 = vmatpush.bf16.msra.mxu0 %v496
    %514 = vmatpush.bf16.msra.mxu0 %v495
    %515 = vmatpush.bf16.msra.mxu0 %v494
    %516 = vmatpush.bf16.msra.mxu0 %v493
    %517 = vmatmul.bf16.gmra.mxu0 %v440
    %v518 = vpop.f32.mrf.mxu0
    %v519 = vadd.f32 %v459, %v518
    %v520 = vpop.f32.mrf.mxu0
    %521 = vdwg.mxu0
    %522 = vst [vmem:[%s9] sm:$0xff] %v519
    // Predicated region
    $region50: #{hybrid_model_forward.1} parent=1 // pred_check
      _
    $region51: #{hybrid_model_forward.1} parent=1 // pred_check_branch
      %524 = sbr.rel (0) target = $region53
    $region52: #{hybrid_model_forward.1} parent=1 // pred_region
      _
    $region53: #{hybrid_model_forward.1} parent=1 // pred_fallthru
      _
    // Predicated region
    $region54: #{hybrid_model_forward.1} parent=1 // pred_check
      _
    $region55: #{hybrid_model_forward.1} parent=1 // pred_check_branch
      %526 = sbr.rel (0) target = $region57
    $region56: #{hybrid_model_forward.1} parent=1 // pred_region
      _
    $region57: #{hybrid_model_forward.1} parent=1 // pred_fallthru
      _
    %527 = vsyncpa [#allocation3], 1
    %528 = vsyncpa [#allocation5], 1

</llo_original>
